<compile_context>
chip_gen: v5e
topology: v5e:2x2
jax: 0.10.0
libtpu: 0.0.40
codegen_flags: <defaults>
</compile_context>

<pallas_src>
import math
from functools import partial

import jax
import jax.numpy as jnp
from jax.experimental import pallas as pl
from jax.experimental.pallas import tpu as pltpu  # noqa: F401  (TPU backend)

# ------------------------- model hyper-parameters (small) -------------------
B = 2            # batch
S = 8            # sequence length
H = 32           # hidden size
NH = 2           # attention heads
DH = H // NH     # head dim
F = 64           # FFN intermediate size
VOCAB = 100
NUM_CLASSES = 5  # task head ("conllsrl") output classes
LN_EPS = 1e-12

BS = B * S
EMB_ROWS = 128   # word (0..99) | pos (100..107) | type (108..109) | zero pad
LANES = 128      # every slab row is lane-dense (128 f32 lanes)
OUT_W = 128      # packed output width: [seq_out | logits | zeros]

# rows of the packed bias / LayerNorm block inside the param slab
ROW_LN_E_G, ROW_LN_E_B = 0, 1
ROW_B_QKV = 2
ROW_B_O = 3
ROW_LN1_G, ROW_LN1_B = 4, 5
ROW_B_1 = 6
ROW_B_2 = 7
ROW_LN2_G, ROW_LN2_B = 8, 9
ROW_B_OUT = 10
N_VEC_ROWS = 11

# ---- single param slab: static row offsets (all sublane-8 aligned) ---------
EMB_OFF = 0                       # (128, H)   embedding table (word|pos|type|0)
WQKV_OFF = EMB_OFF + EMB_ROWS     # (H, 3H)    fused QKV, head-major columns
WO_OFF = WQKV_OFF + H             # (H, H)     attention output proj
W1_OFF = WO_OFF + H               # (H, F)     FFN in
W2_OFF = W1_OFF + H               # (F, H)     FFN out
WOUT_OFF = W2_OFF + F             # (H, 128)   [I_H | Wh | 0] packed head
VECS_OFF = WOUT_OFF + H           # (11, 128)  biases / LayerNorm params
SLAB_ROWS = ((VECS_OFF + N_VEC_ROWS + 7) // 8) * 8   # 336 rows x 128 lanes

# ---- per-call data slab: multi-hot rows then additive attention mask -------
MH_OFF = 0                        # (BS, 128)  multi-hot embedding selector
MASK_OFF = BS                     # (BS, 128)  block-diag + padding mask (first BS lanes)
DATA_ROWS = 2 * BS

# advisory cost estimate (review item: cheap scheduler hint)
_FLOPS = (2 * BS * (EMB_ROWS * H + H * 3 * H + H * F + F * H + H * OUT_W)
          + NH * (2 * BS * BS * DH * 2 + 2 * BS * DH * H))
_TRANS = NH * BS * BS + BS * F + 3 * BS + NH * BS
_BYTES = (SLAB_ROWS + DATA_ROWS + BS) * LANES * 4


def _layer_norm(x, g, b):
    mu = jnp.mean(x, axis=-1, keepdims=True)
    var = jnp.mean(jnp.square(x - mu), axis=-1, keepdims=True)
    return (x - mu) * jax.lax.rsqrt(var + LN_EPS) * g + b


def shared_model_kernel(data_ref, prm_ref, out_ref):
    f32 = jnp.float32

    # ---- static slices of the single param slab (free ref views) -----------
    emb = prm_ref[EMB_OFF:EMB_OFF + EMB_ROWS, :H]            # (128, H)
    wqkv = prm_ref[WQKV_OFF:WQKV_OFF + H, :3 * H]             # (H, 3H) head-major
    wo = prm_ref[WO_OFF:WO_OFF + H, :H]                       # (H, H)
    w1 = prm_ref[W1_OFF:W1_OFF + H, :F]                       # (H, F)
    w2 = prm_ref[W2_OFF:W2_OFF + F, :H]                       # (F, H)
    wout = prm_ref[WOUT_OFF:WOUT_OFF + H, :]                  # (H, 128)
    vec = lambda r, w: prm_ref[VECS_OFF + r:VECS_OFF + r + 1, :w]   # (1, w)

    # ---- per-call data: precomputed in the wrapper (no ints on vector path)
    multi_hot = data_ref[MH_OFF:MH_OFF + BS, :]                # (BS, 128)
    mask_bias = data_ref[MASK_OFF:MASK_OFF + BS, :BS]          # (BS, BS) additive

    # ---- embeddings: multi-hot gather as one MXU matmul (word+pos+type) ----
    x = jnp.dot(multi_hot, emb, preferred_element_type=f32)    # (BS, H)
    x = _layer_norm(x, vec(ROW_LN_E_G, H), vec(ROW_LN_E_B, H))

    # ---- self attention: fused QKV matmul, batched over B per head ---------
    qkv = (jnp.dot(x, wqkv, preferred_element_type=f32)
           + vec(ROW_B_QKV, 3 * H))                            # (BS, 3H) head-major

    scale = 1.0 / math.sqrt(DH)
    attn = None
    for h in range(NH):                                        # static unroll (NH=2)
        base = h * 3 * DH                                      # [q_h|k_h|v_h] block
        qh = qkv[:, base:base + DH]                            # (BS, DH)
        kh = qkv[:, base + DH:base + 2 * DH]                   # (BS, DH)
        vh = qkv[:, base + 2 * DH:base + 3 * DH]               # (BS, DH)
        # q @ k^T without an explicit transpose (contract dim 1 of both)
        s = jax.lax.dot_general(qh, kh, (((1,), (1,)), ((), ())),
                                preferred_element_type=f32) * scale   # (BS, BS)
        s = s + mask_bias                                      # block-diag + padding
        s = s - jnp.max(s, axis=-1, keepdims=True)
        p = jnp.exp(s)
        p = p * pl.reciprocal(jnp.sum(p, axis=-1, keepdims=True), approx=True)
        ctx = jnp.dot(p, vh, preferred_element_type=f32)       # (BS, DH)
        # accumulate ctx_h @ Wo[h*DH:(h+1)*DH, :] -- no lane-dim concat
        contrib = jnp.dot(ctx, wo[h * DH:(h + 1) * DH, :],
                          preferred_element_type=f32)          # (BS, H)
        attn = contrib if attn is None else attn + contrib
    attn = attn + vec(ROW_B_O, H)                              # (BS, H)

    x = _layer_norm(x + attn, vec(ROW_LN1_G, H), vec(ROW_LN1_B, H))

    # ---- feed forward -------------------------------------------------------
    hdn = jnp.dot(x, w1, preferred_element_type=f32) + vec(ROW_B_1, F)
    hdn = jax.nn.gelu(hdn, approximate=True)
    ffn = jnp.dot(hdn, w2, preferred_element_type=f32) + vec(ROW_B_2, H)
    seq = _layer_norm(x + ffn, vec(ROW_LN2_G, H), vec(ROW_LN2_B, H))   # (BS, H)

    # ---- lane-dense packed output: [ sequenceOutput | head logits | zeros ] --
    # wout = [ I_H | Wh | 0 ]  (kept f32 => identity block is bit-exact)
    out_ref[...] = (jnp.dot(seq, wout, preferred_element_type=f32)
                    + vec(ROW_B_OUT, OUT_W))


def shared_model_forward(token_ids, type_ids, attention_masks, params):
    """Stand-in for SharedModelNetwork.forward: returns (sequenceOutput, logits)."""
    f32 = jnp.float32

    # multi-hot embedding selector (word + position + token-type), (BS, 128)
    pos = jnp.arange(S, dtype=jnp.int32)
    ids = jnp.stack(
        [token_ids.reshape(BS).astype(jnp.int32),
         jnp.tile(pos, B) + VOCAB,
         type_ids.reshape(BS).astype(jnp.int32) + (VOCAB + S)],
        axis=1)                                                         # (BS, 3)
    iota = jnp.arange(EMB_ROWS, dtype=jnp.int32)[None, None, :]         # (1, 1, 128)
    multi_hot = jnp.sum((ids[:, :, None] == iota).astype(f32), axis=1)  # (BS, 128)

    # additive attention mask: block-diagonal over batches + key padding
    bidx = jnp.arange(BS, dtype=jnp.int32) // S
    same_batch = (bidx[:, None] == bidx[None, :]).astype(f32)           # (BS, BS)
    key_ok = attention_masks.astype(f32).reshape(1, BS)                 # (1, BS)
    mask_bias = (1.0 - same_batch * key_ok) * -10000.0                  # (BS, BS)
    mask_rows = jnp.zeros((BS, LANES), f32).at[:, :BS].set(mask_bias)   # (BS, 128)

    data = jnp.concatenate([multi_hot, mask_rows], axis=0)              # (2*BS, 128)

    packed = pl.pallas_call(
        shared_model_kernel,
        out_shape=jax.ShapeDtypeStruct((BS, OUT_W), jnp.float32),
        cost_estimate=pl.CostEstimate(flops=_FLOPS, transcendentals=_TRANS,
                                      bytes_accessed=_BYTES),
    )(data, params["slab"])

    packed = packed.reshape(B, S, OUT_W)
    seq_out = packed[:, :, :H]                      # sequenceOutput (dropout = id)
    logits = packed[:, :, H:H + NUM_CLASSES]        # task header 'conllsrl'
    return seq_out, logits


def init_params(key):
    """Deterministic init mirroring initialize_headers(): Linear/Embedding weights
    ~ N(0, 0.02), Linear biases zero, LayerNorm gamma=1 beta=0 -- then packed
    into ONE lane-dense (SLAB_ROWS, 128) f32 slab (single kernel input DMA)."""
    keys = jax.random.split(key, 10)
    std = 0.02
    n = lambda k, shp: (std * jax.random.normal(k, shp)).astype(jnp.float32)
    z = lambda shp: jnp.zeros(shp, jnp.float32)
    o = lambda shp: jnp.ones(shp, jnp.float32)

    # combined embedding table: word | position | token-type | zero padding
    word_emb = n(keys[0], (VOCAB, H))
    pos_emb = n(keys[1], (S, H))
    type_emb = n(keys[2], (2, H))
    emb_table = jnp.zeros((EMB_ROWS, H), jnp.float32)
    emb_table = emb_table.at[:VOCAB].set(word_emb)
    emb_table = emb_table.at[VOCAB:VOCAB + S].set(pos_emb)
    emb_table = emb_table.at[VOCAB + S:VOCAB + S + 2].set(type_emb)

    # fused QKV projection, columns reordered head-major: [q_h | k_h | v_h] per head
    wq, wk, wv = n(keys[3], (H, H)), n(keys[4], (H, H)), n(keys[5], (H, H))
    w_qkv = jnp.concatenate(
        [jnp.concatenate([wq[:, h * DH:(h + 1) * DH],
                          wk[:, h * DH:(h + 1) * DH],
                          wv[:, h * DH:(h + 1) * DH]], axis=1)
         for h in range(NH)], axis=1)                           # (H, 3H)
    b_qkv = z((3 * H,))   # zero bias; would need the same head-major reorder if nonzero

    wo = n(keys[6], (H, H))
    w1 = n(keys[7], (H, F))
    w2 = n(keys[8], (F, H))

    # task head packed with an identity block so one matmul emits
    # [sequenceOutput | logits | 0] lane-dense (OUT_W = 128 lanes).
    wh = n(keys[9], (H, NUM_CLASSES))
    bh = z((NUM_CLASSES,))
    w_out = jnp.zeros((H, OUT_W), jnp.float32)
    w_out = w_out.at[:, :H].set(jnp.eye(H, dtype=jnp.float32))
    w_out = w_out.at[:, H:H + NUM_CLASSES].set(wh)
    b_out = jnp.zeros((OUT_W,), jnp.float32).at[H:H + NUM_CLASSES].set(bh)

    def row(v):
        v = jnp.asarray(v, jnp.float32).reshape(-1)
        return jnp.zeros((LANES,), jnp.float32).at[:v.shape[0]].set(v)

    vecs = jnp.stack([
        row(o((H,))), row(z((H,))),      # 0,1: embedding LayerNorm gamma / beta
        row(b_qkv),                      # 2:   fused qkv bias (head-major)
        row(z((H,))),                    # 3:   attention output bias
        row(o((H,))), row(z((H,))),      # 4,5: post-attention LayerNorm
        row(z((F,))),                    # 6:   FFN intermediate bias
        row(z((H,))),                    # 7:   FFN output bias
        row(o((H,))), row(z((H,))),      # 8,9: output LayerNorm
        b_out,                           # 10:  packed head bias
    ])                                   # (N_VEC_ROWS, 128)

    def pad_lanes(m):
        r, c = m.shape
        return jnp.zeros((r, LANES), jnp.float32).at[:, :c].set(m)

    slab = jnp.zeros((SLAB_ROWS, LANES), jnp.float32)
    slab = slab.at[EMB_OFF:EMB_OFF + EMB_ROWS].set(pad_lanes(emb_table))
    slab = slab.at[WQKV_OFF:WQKV_OFF + H].set(pad_lanes(w_qkv))
    slab = slab.at[WO_OFF:WO_OFF + H].set(pad_lanes(wo))
    slab = slab.at[W1_OFF:W1_OFF + H].set(pad_lanes(w1))
    slab = slab.at[W2_OFF:W2_OFF + F].set(pad_lanes(w2))
    slab = slab.at[WOUT_OFF:WOUT_OFF + H].set(w_out)
    slab = slab.at[VECS_OFF:VECS_OFF + N_VEC_ROWS].set(vecs)

    return {"slab": slab}


if __name__ == "__main__":
    key = jax.random.PRNGKey(0)
    pkey, tkey = jax.random.split(key)
    params = init_params(pkey)

    token_ids = jax.random.randint(tkey, (B, S), 0, VOCAB, dtype=jnp.int32)
    type_ids = jnp.zeros((B, S), dtype=jnp.int32)
    attention_masks = jnp.ones((B, S), dtype=jnp.int32).at[:, -2:].set(0)  # pad last 2

    fwd = jax.jit(partial(shared_model_forward, params=params))
    seq_out, logits = fwd(token_ids, type_ids, attention_masks)
    jax.block_until_ready((seq_out, logits))

    assert seq_out.shape == (B, S, H)
    assert logits.shape == (B, S, NUM_CLASSES)
    assert bool(jnp.all(jnp.isfinite(seq_out))) and bool(jnp.all(jnp.isfinite(logits)))
    print("KERNEL_OK")
</pallas_src>

<mosaic_0001>
module attributes {stable_mosaic.version = 11 : i64} {
  func.func @shared_model_kernel(%arg0: memref<32x128xf32, #tpu.memory_space<vmem>>, %arg1: memref<336x128xf32, #tpu.memory_space<vmem>>, %arg2: memref<16x128xf32, #tpu.memory_space<vmem>>) attributes {dimension_semantics = [], scalar_prefetch = 0 : i64, scratch_operands = 0 : i64, tpu.core_type = #tpu.core_type<tc>} {
    %c0 = arith.constant 0 : index
    %c0_0 = arith.constant 0 : index
    %0 = vector.load %arg1[%c0, %c0_0] : memref<336x128xf32, #tpu.memory_space<vmem>>, vector<128x32xf32>
    %c128 = arith.constant 128 : index
    %c0_1 = arith.constant 0 : index
    %1 = vector.load %arg1[%c128, %c0_1] : memref<336x128xf32, #tpu.memory_space<vmem>>, vector<32x96xf32>
    %c160 = arith.constant 160 : index
    %c0_2 = arith.constant 0 : index
    %2 = vector.load %arg1[%c160, %c0_2] : memref<336x128xf32, #tpu.memory_space<vmem>>, vector<32x32xf32>
    %c192 = arith.constant 192 : index
    %c0_3 = arith.constant 0 : index
    %3 = vector.load %arg1[%c192, %c0_3] : memref<336x128xf32, #tpu.memory_space<vmem>>, vector<32x64xf32>
    %c224 = arith.constant 224 : index
    %c0_4 = arith.constant 0 : index
    %4 = vector.load %arg1[%c224, %c0_4] : memref<336x128xf32, #tpu.memory_space<vmem>>, vector<64x32xf32>
    %c288 = arith.constant 288 : index
    %c0_5 = arith.constant 0 : index
    %5 = vector.load %arg1[%c288, %c0_5] : memref<336x128xf32, #tpu.memory_space<vmem>>, vector<32x128xf32>
    %c0_6 = arith.constant 0 : index
    %c0_7 = arith.constant 0 : index
    %6 = vector.load %arg0[%c0_6, %c0_7] : memref<32x128xf32, #tpu.memory_space<vmem>>, vector<16x128xf32>
    %c16 = arith.constant 16 : index
    %c0_8 = arith.constant 0 : index
    %7 = vector.load %arg0[%c16, %c0_8] : memref<32x128xf32, #tpu.memory_space<vmem>>, vector<16x16xf32>
    %cst = arith.constant dense<0.000000e+00> : vector<16x32xf32>
    %8 = tpu.matmul %6, %0, %cst {dimension_numbers = #tpu.dot_dimension_numbers<[1], [0], [0], [1], [0, 0, 1, 1], [], []>} : vector<16x128xf32>, vector<128x32xf32>, vector<16x32xf32> -> vector<16x32xf32>
    %c320 = arith.constant 320 : index
    %c0_9 = arith.constant 0 : index
    %9 = vector.load %arg1[%c320, %c0_9] : memref<336x128xf32, #tpu.memory_space<vmem>>, vector<1x32xf32>
    %c321 = arith.constant 321 : index
    %c0_10 = arith.constant 0 : index
    %10 = vector.load %arg1[%c321, %c0_10] : memref<336x128xf32, #tpu.memory_space<vmem>>, vector<1x32xf32>
    %cst_11 = arith.constant dense<0.000000e+00> : vector<16xf32>
    %11 = vector.multi_reduction <add>, %8, %cst_11 [1] : vector<16x32xf32> to vector<16xf32>
    %12 = vector.shape_cast %11 : vector<16xf32> to vector<16x1xf32>
    %cst_12 = arith.constant 3.200000e+01 : f32
    %13 = vector.broadcast %cst_12 : f32 to vector<16x1xf32>
    %14 = arith.divf %12, %13 : vector<16x1xf32>
    %15 = vector.broadcast %14 : vector<16x1xf32> to vector<16x32xf32>
    %16 = arith.subf %8, %15 : vector<16x32xf32>
    %17 = arith.mulf %16, %16 : vector<16x32xf32>
    %cst_13 = arith.constant dense<0.000000e+00> : vector<16xf32>
    %18 = vector.multi_reduction <add>, %17, %cst_13 [1] : vector<16x32xf32> to vector<16xf32>
    %19 = vector.shape_cast %18 : vector<16xf32> to vector<16x1xf32>
    %cst_14 = arith.constant 3.200000e+01 : f32
    %20 = vector.broadcast %cst_14 : f32 to vector<16x1xf32>
    %21 = arith.divf %19, %20 : vector<16x1xf32>
    %22 = vector.broadcast %14 : vector<16x1xf32> to vector<16x32xf32>
    %23 = arith.subf %8, %22 : vector<16x32xf32>
    %cst_15 = arith.constant 9.99999996E-13 : f32
    %24 = vector.broadcast %cst_15 : f32 to vector<16x1xf32>
    %25 = arith.addf %21, %24 : vector<16x1xf32>
    %26 = math.rsqrt %25 : vector<16x1xf32>
    %27 = vector.broadcast %26 : vector<16x1xf32> to vector<16x32xf32>
    %28 = arith.mulf %23, %27 : vector<16x32xf32>
    %29 = vector.broadcast %9 : vector<1x32xf32> to vector<16x32xf32>
    %30 = arith.mulf %28, %29 : vector<16x32xf32>
    %31 = vector.broadcast %10 : vector<1x32xf32> to vector<16x32xf32>
    %32 = arith.addf %30, %31 : vector<16x32xf32>
    %cst_16 = arith.constant dense<0.000000e+00> : vector<16x96xf32>
    %33 = tpu.matmul %32, %1, %cst_16 {dimension_numbers = #tpu.dot_dimension_numbers<[1], [0], [0], [1], [0, 0, 1, 1], [], []>} : vector<16x32xf32>, vector<32x96xf32>, vector<16x96xf32> -> vector<16x96xf32>
    %c322 = arith.constant 322 : index
    %c0_17 = arith.constant 0 : index
    %34 = vector.load %arg1[%c322, %c0_17] : memref<336x128xf32, #tpu.memory_space<vmem>>, vector<1x96xf32>
    %35 = vector.broadcast %34 : vector<1x96xf32> to vector<16x96xf32>
    %36 = arith.addf %33, %35 : vector<16x96xf32>
    %37 = vector.extract_strided_slice %36 {offsets = [0, 0], sizes = [16, 16], strides = [1, 1]} : vector<16x96xf32> to vector<16x16xf32>
    %38 = vector.extract_strided_slice %36 {offsets = [0, 16], sizes = [16, 16], strides = [1, 1]} : vector<16x96xf32> to vector<16x16xf32>
    %39 = vector.extract_strided_slice %36 {offsets = [0, 32], sizes = [16, 16], strides = [1, 1]} : vector<16x96xf32> to vector<16x16xf32>
    %cst_18 = arith.constant dense<0.000000e+00> : vector<16x16xf32>
    %40 = tpu.matmul %37, %38, %cst_18 {dimension_numbers = #tpu.dot_dimension_numbers<[1], [1], [0], [0], [0, 0, 1, 0], [], []>} : vector<16x16xf32>, vector<16x16xf32>, vector<16x16xf32> -> vector<16x16xf32>
    %cst_19 = arith.constant 2.500000e-01 : f32
    %41 = vector.broadcast %cst_19 : f32 to vector<16x16xf32>
    %42 = arith.mulf %40, %41 : vector<16x16xf32>
    %43 = arith.addf %42, %7 : vector<16x16xf32>
    %cst_20 = arith.constant dense<0xFF800000> : vector<16xf32>
    %44 = vector.multi_reduction <maximumf>, %43, %cst_20 [1] : vector<16x16xf32> to vector<16xf32>
    %45 = vector.shape_cast %44 : vector<16xf32> to vector<16x1xf32>
    %46 = vector.broadcast %45 : vector<16x1xf32> to vector<16x16xf32>
    %47 = arith.subf %43, %46 : vector<16x16xf32>
    %48 = math.exp %47 : vector<16x16xf32>
    %cst_21 = arith.constant dense<0.000000e+00> : vector<16xf32>
    %49 = vector.multi_reduction <add>, %48, %cst_21 [1] : vector<16x16xf32> to vector<16xf32>
    %50 = vector.shape_cast %49 : vector<16xf32> to vector<16x1xf32>
    %51 = tpu.reciprocal %50 {approx = true} : vector<16x1xf32> -> vector<16x1xf32>
    %52 = vector.broadcast %51 : vector<16x1xf32> to vector<16x16xf32>
    %53 = arith.mulf %48, %52 : vector<16x16xf32>
    %cst_22 = arith.constant dense<0.000000e+00> : vector<16x16xf32>
    %54 = tpu.matmul %53, %39, %cst_22 {dimension_numbers = #tpu.dot_dimension_numbers<[1], [0], [0], [1], [0, 0, 1, 1], [], []>} : vector<16x16xf32>, vector<16x16xf32>, vector<16x16xf32> -> vector<16x16xf32>
    %55 = vector.extract_strided_slice %2 {offsets = [0, 0], sizes = [16, 32], strides = [1, 1]} : vector<32x32xf32> to vector<16x32xf32>
    %cst_23 = arith.constant dense<0.000000e+00> : vector<16x32xf32>
    %56 = tpu.matmul %54, %55, %cst_23 {dimension_numbers = #tpu.dot_dimension_numbers<[1], [0], [0], [1], [0, 0, 1, 1], [], []>} : vector<16x16xf32>, vector<16x32xf32>, vector<16x32xf32> -> vector<16x32xf32>
    %57 = vector.extract_strided_slice %36 {offsets = [0, 48], sizes = [16, 16], strides = [1, 1]} : vector<16x96xf32> to vector<16x16xf32>
    %58 = vector.extract_strided_slice %36 {offsets = [0, 64], sizes = [16, 16], strides = [1, 1]} : vector<16x96xf32> to vector<16x16xf32>
    %59 = vector.extract_strided_slice %36 {offsets = [0, 80], sizes = [16, 16], strides = [1, 1]} : vector<16x96xf32> to vector<16x16xf32>
    %cst_24 = arith.constant dense<0.000000e+00> : vector<16x16xf32>
    %60 = tpu.matmul %57, %58, %cst_24 {dimension_numbers = #tpu.dot_dimension_numbers<[1], [1], [0], [0], [0, 0, 1, 0], [], []>} : vector<16x16xf32>, vector<16x16xf32>, vector<16x16xf32> -> vector<16x16xf32>
    %cst_25 = arith.constant 2.500000e-01 : f32
    %61 = vector.broadcast %cst_25 : f32 to vector<16x16xf32>
    %62 = arith.mulf %60, %61 : vector<16x16xf32>
    %63 = arith.addf %62, %7 : vector<16x16xf32>
    %cst_26 = arith.constant dense<0xFF800000> : vector<16xf32>
    %64 = vector.multi_reduction <maximumf>, %63, %cst_26 [1] : vector<16x16xf32> to vector<16xf32>
    %65 = vector.shape_cast %64 : vector<16xf32> to vector<16x1xf32>
    %66 = vector.broadcast %65 : vector<16x1xf32> to vector<16x16xf32>
    %67 = arith.subf %63, %66 : vector<16x16xf32>
    %68 = math.exp %67 : vector<16x16xf32>
    %cst_27 = arith.constant dense<0.000000e+00> : vector<16xf32>
    %69 = vector.multi_reduction <add>, %68, %cst_27 [1] : vector<16x16xf32> to vector<16xf32>
    %70 = vector.shape_cast %69 : vector<16xf32> to vector<16x1xf32>
    %71 = tpu.reciprocal %70 {approx = true} : vector<16x1xf32> -> vector<16x1xf32>
    %72 = vector.broadcast %71 : vector<16x1xf32> to vector<16x16xf32>
    %73 = arith.mulf %68, %72 : vector<16x16xf32>
    %cst_28 = arith.constant dense<0.000000e+00> : vector<16x16xf32>
    %74 = tpu.matmul %73, %59, %cst_28 {dimension_numbers = #tpu.dot_dimension_numbers<[1], [0], [0], [1], [0, 0, 1, 1], [], []>} : vector<16x16xf32>, vector<16x16xf32>, vector<16x16xf32> -> vector<16x16xf32>
    %75 = vector.extract_strided_slice %2 {offsets = [16, 0], sizes = [16, 32], strides = [1, 1]} : vector<32x32xf32> to vector<16x32xf32>
    %cst_29 = arith.constant dense<0.000000e+00> : vector<16x32xf32>
    %76 = tpu.matmul %74, %75, %cst_29 {dimension_numbers = #tpu.dot_dimension_numbers<[1], [0], [0], [1], [0, 0, 1, 1], [], []>} : vector<16x16xf32>, vector<16x32xf32>, vector<16x32xf32> -> vector<16x32xf32>
    %77 = arith.addf %56, %76 : vector<16x32xf32>
    %c323 = arith.constant 323 : index
    %c0_30 = arith.constant 0 : index
    %78 = vector.load %arg1[%c323, %c0_30] : memref<336x128xf32, #tpu.memory_space<vmem>>, vector<1x32xf32>
    %79 = vector.broadcast %78 : vector<1x32xf32> to vector<16x32xf32>
    %80 = arith.addf %77, %79 : vector<16x32xf32>
    %81 = arith.addf %32, %80 : vector<16x32xf32>
    %c324 = arith.constant 324 : index
    %c0_31 = arith.constant 0 : index
    %82 = vector.load %arg1[%c324, %c0_31] : memref<336x128xf32, #tpu.memory_space<vmem>>, vector<1x32xf32>
    %c325 = arith.constant 325 : index
    %c0_32 = arith.constant 0 : index
    %83 = vector.load %arg1[%c325, %c0_32] : memref<336x128xf32, #tpu.memory_space<vmem>>, vector<1x32xf32>
    %cst_33 = arith.constant dense<0.000000e+00> : vector<16xf32>
    %84 = vector.multi_reduction <add>, %81, %cst_33 [1] : vector<16x32xf32> to vector<16xf32>
    %85 = vector.shape_cast %84 : vector<16xf32> to vector<16x1xf32>
    %cst_34 = arith.constant 3.200000e+01 : f32
    %86 = vector.broadcast %cst_34 : f32 to vector<16x1xf32>
    %87 = arith.divf %85, %86 : vector<16x1xf32>
    %88 = vector.broadcast %87 : vector<16x1xf32> to vector<16x32xf32>
    %89 = arith.subf %81, %88 : vector<16x32xf32>
    %90 = arith.mulf %89, %89 : vector<16x32xf32>
    %cst_35 = arith.constant dense<0.000000e+00> : vector<16xf32>
    %91 = vector.multi_reduction <add>, %90, %cst_35 [1] : vector<16x32xf32> to vector<16xf32>
    %92 = vector.shape_cast %91 : vector<16xf32> to vector<16x1xf32>
    %cst_36 = arith.constant 3.200000e+01 : f32
    %93 = vector.broadcast %cst_36 : f32 to vector<16x1xf32>
    %94 = arith.divf %92, %93 : vector<16x1xf32>
    %95 = vector.broadcast %87 : vector<16x1xf32> to vector<16x32xf32>
    %96 = arith.subf %81, %95 : vector<16x32xf32>
    %cst_37 = arith.constant 9.99999996E-13 : f32
    %97 = vector.broadcast %cst_37 : f32 to vector<16x1xf32>
    %98 = arith.addf %94, %97 : vector<16x1xf32>
    %99 = math.rsqrt %98 : vector<16x1xf32>
    %100 = vector.broadcast %99 : vector<16x1xf32> to vector<16x32xf32>
    %101 = arith.mulf %96, %100 : vector<16x32xf32>
    %102 = vector.broadcast %82 : vector<1x32xf32> to vector<16x32xf32>
    %103 = arith.mulf %101, %102 : vector<16x32xf32>
    %104 = vector.broadcast %83 : vector<1x32xf32> to vector<16x32xf32>
    %105 = arith.addf %103, %104 : vector<16x32xf32>
    %cst_38 = arith.constant dense<0.000000e+00> : vector<16x64xf32>
    %106 = tpu.matmul %105, %3, %cst_38 {dimension_numbers = #tpu.dot_dimension_numbers<[1], [0], [0], [1], [0, 0, 1, 1], [], []>} : vector<16x32xf32>, vector<32x64xf32>, vector<16x64xf32> -> vector<16x64xf32>
    %c326 = arith.constant 326 : index
    %c0_39 = arith.constant 0 : index
    %107 = vector.load %arg1[%c326, %c0_39] : memref<336x128xf32, #tpu.memory_space<vmem>>, vector<1x64xf32>
    %108 = vector.broadcast %107 : vector<1x64xf32> to vector<16x64xf32>
    %109 = arith.addf %106, %108 : vector<16x64xf32>
    %110 = arith.mulf %109, %109 : vector<16x64xf32>
    %111 = arith.mulf %109, %110 : vector<16x64xf32>
    %cst_40 = arith.constant 4.471500e-02 : f32
    %112 = vector.broadcast %cst_40 : f32 to vector<16x64xf32>
    %113 = arith.mulf %112, %111 : vector<16x64xf32>
    %114 = arith.addf %109, %113 : vector<16x64xf32>
    %cst_41 = arith.constant 0.797884583 : f32
    %115 = vector.broadcast %cst_41 : f32 to vector<16x64xf32>
    %116 = arith.mulf %115, %114 : vector<16x64xf32>
    %117 = math.tanh %116 : vector<16x64xf32>
    %cst_42 = arith.constant 1.000000e+00 : f32
    %118 = vector.broadcast %cst_42 : f32 to vector<16x64xf32>
    %119 = arith.addf %118, %117 : vector<16x64xf32>
    %cst_43 = arith.constant 5.000000e-01 : f32
    %120 = vector.broadcast %cst_43 : f32 to vector<16x64xf32>
    %121 = arith.mulf %120, %119 : vector<16x64xf32>
    %122 = arith.mulf %109, %121 : vector<16x64xf32>
    %cst_44 = arith.constant dense<0.000000e+00> : vector<16x32xf32>
    %123 = tpu.matmul %122, %4, %cst_44 {dimension_numbers = #tpu.dot_dimension_numbers<[1], [0], [0], [1], [0, 0, 1, 1], [], []>} : vector<16x64xf32>, vector<64x32xf32>, vector<16x32xf32> -> vector<16x32xf32>
    %c327 = arith.constant 327 : index
    %c0_45 = arith.constant 0 : index
    %124 = vector.load %arg1[%c327, %c0_45] : memref<336x128xf32, #tpu.memory_space<vmem>>, vector<1x32xf32>
    %125 = vector.broadcast %124 : vector<1x32xf32> to vector<16x32xf32>
    %126 = arith.addf %123, %125 : vector<16x32xf32>
    %127 = arith.addf %105, %126 : vector<16x32xf32>
    %c328 = arith.constant 328 : index
    %c0_46 = arith.constant 0 : index
    %128 = vector.load %arg1[%c328, %c0_46] : memref<336x128xf32, #tpu.memory_space<vmem>>, vector<1x32xf32>
    %c329 = arith.constant 329 : index
    %c0_47 = arith.constant 0 : index
    %129 = vector.load %arg1[%c329, %c0_47] : memref<336x128xf32, #tpu.memory_space<vmem>>, vector<1x32xf32>
    %cst_48 = arith.constant dense<0.000000e+00> : vector<16xf32>
    %130 = vector.multi_reduction <add>, %127, %cst_48 [1] : vector<16x32xf32> to vector<16xf32>
    %131 = vector.shape_cast %130 : vector<16xf32> to vector<16x1xf32>
    %cst_49 = arith.constant 3.200000e+01 : f32
    %132 = vector.broadcast %cst_49 : f32 to vector<16x1xf32>
    %133 = arith.divf %131, %132 : vector<16x1xf32>
    %134 = vector.broadcast %133 : vector<16x1xf32> to vector<16x32xf32>
    %135 = arith.subf %127, %134 : vector<16x32xf32>
    %136 = arith.mulf %135, %135 : vector<16x32xf32>
    %cst_50 = arith.constant dense<0.000000e+00> : vector<16xf32>
    %137 = vector.multi_reduction <add>, %136, %cst_50 [1] : vector<16x32xf32> to vector<16xf32>
    %138 = vector.shape_cast %137 : vector<16xf32> to vector<16x1xf32>
    %cst_51 = arith.constant 3.200000e+01 : f32
    %139 = vector.broadcast %cst_51 : f32 to vector<16x1xf32>
    %140 = arith.divf %138, %139 : vector<16x1xf32>
    %141 = vector.broadcast %133 : vector<16x1xf32> to vector<16x32xf32>
    %142 = arith.subf %127, %141 : vector<16x32xf32>
    %cst_52 = arith.constant 9.99999996E-13 : f32
    %143 = vector.broadcast %cst_52 : f32 to vector<16x1xf32>
    %144 = arith.addf %140, %143 : vector<16x1xf32>
    %145 = math.rsqrt %144 : vector<16x1xf32>
    %146 = vector.broadcast %145 : vector<16x1xf32> to vector<16x32xf32>
    %147 = arith.mulf %142, %146 : vector<16x32xf32>
    %148 = vector.broadcast %128 : vector<1x32xf32> to vector<16x32xf32>
    %149 = arith.mulf %147, %148 : vector<16x32xf32>
    %150 = vector.broadcast %129 : vector<1x32xf32> to vector<16x32xf32>
    %151 = arith.addf %149, %150 : vector<16x32xf32>
    %cst_53 = arith.constant dense<0.000000e+00> : vector<16x128xf32>
    %152 = tpu.matmul %151, %5, %cst_53 {dimension_numbers = #tpu.dot_dimension_numbers<[1], [0], [0], [1], [0, 0, 1, 1], [], []>} : vector<16x32xf32>, vector<32x128xf32>, vector<16x128xf32> -> vector<16x128xf32>
    %c330 = arith.constant 330 : index
    %c0_54 = arith.constant 0 : index
    %153 = vector.load %arg1[%c330, %c0_54] : memref<336x128xf32, #tpu.memory_space<vmem>>, vector<1x128xf32>
    %154 = vector.broadcast %153 : vector<1x128xf32> to vector<16x128xf32>
    %155 = arith.addf %152, %154 : vector<16x128xf32>
    %c0_55 = arith.constant 0 : index
    %c0_56 = arith.constant 0 : index
    %156 = vector.load %arg2[%c0_55, %c0_56] : memref<16x128xf32, #tpu.memory_space<vmem>>, vector<16x128xf32>
    tpu.vector_store %arg2[%c0_55, %c0_56], %155 {strides = array<i32>} : memref<16x128xf32, #tpu.memory_space<vmem>>, vector<16x128xf32>,
    return
  }
}

</mosaic_0001>

<llo_original>
// kernel: mul.8
$region0: #{mul.8}
  %s0 = inlined_call_operand.vmem [shape: f32[2,8], index: 0, kind: input, shape index: {}]
  %s1 = inlined_call_operand.vmem [shape: f32[16], index: 1, kind: output, shape index: {}]
  $region1: #{mul.8} parent=0
    #allocation0 [shape = 'u8[4096]{0}', space=vmem, size = 0x1000, scoped, tag = 'scoped mem for output reshape']
    #allocation1 [shape = 'u8[4096]{0}', space=vmem, size = 0x1000, scoped, tag = 'scoped mem for input reshape']
    %s3 = ssub.s32 4, 1
    %v4 = vld [vmem:[%s0] sm:%s3]
    %5 = vst [vmem:[#allocation1] sm:%s3] %v4
    %v6 = vld [vmem:[#allocation1] sm:$0x1]
    %vm7 = vcmask 64512
    %8 = vst.msk [vmem:[#allocation0] sm:$0x1] %vm7, %v6
    %s9 = scalar_lea.vmem [#allocation1], 1
    %v10 = vld [vmem:[%s9] sm:$0x1]
    %11 = vrot.lane.b32.xlu0 %v10, 8
    %v12 = vpop.permute.xlu0 %11
    %vm13 = vcmask 130112
    %14 = vst.msk [vmem:[#allocation0] sm:$0x1] %vm13, %v12
    %s16 = ssub.s32 2, 1
    %v17 = vld [vmem:[#allocation0] sm:%s16]
    %s19 = ssub.s32 2, 1
    %20 = vst [vmem:[%s1] sm:%s19] %v17

// kernel: shared_model_forward.1
$region0: #{shared_model_forward.1}
  #allocation0 [shape = 'u32[]', space=smem, size = 0x4, offset = 0x4, fixed_abs, tag = 'smem constant byte address 0x4 - core index']
  #allocation1 [shape = 'u32[72,128]{1,0:T(1,128)}', space=vmem, size = 0x9000, scoped, tag = 'internal scratch']
  %s0 = inlined_call_operand.vmem [shape: f32[32,128], index: 0, kind: input, shape index: {}]
  %s1 = inlined_call_operand.hbm [shape: f32[336,128], index: 1, kind: input, shape index: {}]
  %s2 = inlined_call_operand.vmem [shape: f32[16,128], index: 2, kind: output, shape index: {}]
  %s3 = sld [smem:[#allocation0]]
  $region22: #{shared_model_forward.1} parent=0
    _
  %s5 = ssub.s32 1, %s3
  %s6 = scalar_select 0, %s5, %s3
  $region1: #{shared_model_forward.1} parent=0
    #allocation2 [shape = 'u8[172032]{0}', space=vmem, size = 0x2a000, scoped, tag = 'input window, operand 1, single buffered']
    #allocation3 [shape = 's32[1]{0}', space=sflag, size = 0x4, scoped, tag = 'scoped memory for shared_model_forward.1']
    %7 = vsyncpa [#allocation3], 0
    // Predicated region
    $region2: #{shared_model_forward.1} parent=1 // pred_check
      _
    $region3: #{shared_model_forward.1} parent=1 // pred_check_branch
      %9 = sbr.rel (0) target = $region5
    $region4: #{shared_model_forward.1} parent=1 // pred_region
      _
    $region5: #{shared_model_forward.1} parent=1 // pred_fallthru
      _
    // Predicated region
    $region6: #{shared_model_forward.1} parent=1 // pred_check
      _
    $region7: #{shared_model_forward.1} parent=1 // pred_check_branch
      %11 = sbr.rel (0) target = $region9
    $region8: #{shared_model_forward.1} parent=1 // pred_region
      %13 = vsyncadd [#allocation3], 0
      %s14 = sshll.u32 %s1, 4
      %s15 = int_to_ptr.hbm [resolvable:$true] %s14
      %s16 = sshll.u32 [#allocation2], 4
      %s17 = int_to_ptr.vmem [resolvable:$true] %s16
      %22 = dma.hbm_to_vmem [thread:$0]  %s15, 5376, %s17, [#allocation3], 128, 128, 8
    $region9: #{shared_model_forward.1} parent=1 // pred_fallthru
      _
    // Predicated region
    $region10: #{shared_model_forward.1} parent=1 // pred_check
      _
    $region11: #{shared_model_forward.1} parent=1 // pred_check_branch
      %24 = sbr.rel (0) target = $region13
    $region12: #{shared_model_forward.1} parent=1 // pred_region
      %26 = dma.done [#allocation3], 5376
    $region13: #{shared_model_forward.1} parent=1 // pred_fallthru
      _
    %v27 = vld [vmem:[#allocation2] sm:$0xff]
    %v28 = vld [vmem:[#allocation2 + $0x8] sm:$0xff]
    %v29 = vld [vmem:[#allocation2 + $0x10] sm:$0xff]
    %v30 = vld [vmem:[#allocation2 + $0x18] sm:$0xff]
    %v31 = vld [vmem:[#allocation2 + $0x20] sm:$0xff]
    %v32 = vld [vmem:[#allocation2 + $0x28] sm:$0xff]
    %v33 = vld [vmem:[#allocation2 + $0x30] sm:$0xff]
    %v34 = vld [vmem:[#allocation2 + $0x38] sm:$0xff]
    %v35 = vld [vmem:[#allocation2 + $0x40] sm:$0xff]
    %v36 = vld [vmem:[#allocation2 + $0x48] sm:$0xff]
    %v37 = vld [vmem:[#allocation2 + $0x50] sm:$0xff]
    %v38 = vld [vmem:[#allocation2 + $0x58] sm:$0xff]
    %v39 = vld [vmem:[#allocation2 + $0x60] sm:$0xff]
    %v40 = vld [vmem:[#allocation2 + $0x68] sm:$0xff]
    %v41 = vld [vmem:[#allocation2 + $0x70] sm:$0xff]
    %v42 = vld [vmem:[#allocation2 + $0x78] sm:$0xff]
    %v43 = vld [vmem:[#allocation2 + $0x80] sm:$0xff]
    %v44 = vld [vmem:[#allocation2 + $0x88] sm:$0xff]
    %v45 = vld [vmem:[#allocation2 + $0x90] sm:$0xff]
    %v46 = vld [vmem:[#allocation2 + $0x98] sm:$0xff]
    %v47 = vld [vmem:[#allocation2 + $0xa0] sm:$0xff]
    %v48 = vld [vmem:[#allocation2 + $0xa8] sm:$0xff]
    %v49 = vld [vmem:[#allocation2 + $0xb0] sm:$0xff]
    %v50 = vld [vmem:[#allocation2 + $0xb8] sm:$0xff]
    %v51 = vld [vmem:[#allocation2 + $0xc0] sm:$0xff]
    %v52 = vld [vmem:[#allocation2 + $0xc8] sm:$0xff]
    %v53 = vld [vmem:[#allocation2 + $0xd0] sm:$0xff]
    %v54 = vld [vmem:[#allocation2 + $0xd8] sm:$0xff]
    %v55 = vld [vmem:[#allocation2 + $0xe0] sm:$0xff]
    %v56 = vld [vmem:[#allocation2 + $0xe8] sm:$0xff]
    %v57 = vld [vmem:[#allocation2 + $0xf0] sm:$0xff]
    %v58 = vld [vmem:[#allocation2 + $0xf8] sm:$0xff]
    %v59 = vld [vmem:[#allocation2 + $0x100] sm:$0xff]
    %v60 = vld [vmem:[#allocation2 + $0x108] sm:$0xff]
    %v61 = vld [vmem:[#allocation2 + $0x110] sm:$0xff]
    %v62 = vld [vmem:[#allocation2 + $0x118] sm:$0xff]
    %v63 = vld [vmem:[#allocation2 + $0x120] sm:$0xff]
    %v64 = vld [vmem:[#allocation2 + $0x128] sm:$0xff]
    %v65 = vld [vmem:[#allocation2 + $0x130] sm:$0xff]
    %v66 = vld [vmem:[#allocation2 + $0x138] sm:$0xff]
    %v67 = vld [vmem:[%s0] sm:$0xff]
    %v68 = vld [vmem:[%s0 + $0x8] sm:$0xff]
    %v69 = vld [vmem:[%s0 + $0x10] sm:$0xff]
    %v70 = vld [vmem:[%s0 + $0x18] sm:$0xff]
    %71 = vmatpush.msra.mxu0 %v42
    %72 = vmatpush.msra.mxu0 %v41
    %73 = vmatpush.msra.mxu0 %v40
    %74 = vmatpush.msra.mxu0 %v39
    %75 = vmatpush.msra.mxu0 %v38
    %76 = vmatpush.msra.mxu0 %v37
    %77 = vmatpush.msra.mxu0 %v36
    %78 = vmatpush.msra.mxu0 %v35
    %79 = vmatpush.msra.mxu0 %v34
    %80 = vmatpush.msra.mxu0 %v33
    %81 = vmatpush.msra.mxu0 %v32
    %82 = vmatpush.msra.mxu0 %v31
    %83 = vmatpush.msra.mxu0 %v30
    %84 = vmatpush.msra.mxu0 %v29
    %85 = vmatpush.msra.mxu0 %v28
    %86 = vmatpush.msra.mxu0 %v27
    %87 = vmatmul.f32.gmra.mxu0 %v67
    %v88 = vpop.f32.mrf.mxu0
    %v89 = vadd.f32 0.0, %v88
    %90 = vmatmul.f32.gmra.mxu0 %v68
    %v91 = vpop.f32.mrf.mxu0
    %v92 = vadd.f32 0.0, %v91
    %93 = vdwg.mxu0
    %v94 = vld [vmem:[#allocation2 + $0x140] sm:$0x1]
    %v95 = vld [vmem:[#allocation2 + $0x141] sm:$0x1]
    %vm96 = vcmask 261120
    %v97 = vsel %vm96, %v89, 0.0
    %98 = vadd.xlane.f32.xlu0 %v97
    %v99 = vpop.xlane.xlu0 %98
    %v100 = vsel %vm96, %v92, 0.0
    %101 = vadd.xlane.f32.xlu0 %v100
    %v102 = vpop.xlane.xlu0 %101
    %v103 = vrcp.pop 32.0
    %v104 = vmul.f32 32.0, %v103
    %v105 = vsub.f32 1.0, %v104
    %v106 = vmul.f32 %v103, %v105
    %v107 = vadd.f32 %v103, %v106
    %vm108 = vweird.f32 %v103
    %v109 = vsel %vm108, %v103, %v107
    %v110 = vmul.f32 %v99, %v109
    %v111 = vmul.f32 %v102, %v109
    %v112 = vsub.f32 %v89, %v110
    %v113 = vsub.f32 %v92, %v111
    %v114 = vmul.f32 %v112, %v112
    %v115 = vmul.f32 %v113, %v113
    %v116 = vsel %vm96, %v114, 0.0
    %117 = vadd.xlane.f32.xlu0 %v116
    %v118 = vpop.xlane.xlu0 %117
    %v119 = vsel %vm96, %v115, 0.0
    %120 = vadd.xlane.f32.xlu0 %v119
    %v121 = vpop.xlane.xlu0 %120
    %v122 = vmul.f32 %v118, %v109
    %v123 = vmul.f32 %v121, %v109
    %v124 = vadd.f32 %v122, 1e-12
    %v125 = vadd.f32 %v123, 1e-12
    %v126 = vrsqrt.pop %v124
    %v127 = vmul.f32 %v126, %v124
    %v128 = vmul.f32 %v127, %v126
    %v129 = vmul.f32 0.5, %v128
    %v130 = vsub.f32 1.5, %v129
    %v131 = vmul.f32 %v126, %v130
    %vm132 = vweird.f32 %v124
    %vm133 = vweird.f32 %v126
    %vm134 = vmor %vm132, %vm133
    %v135 = vsel %vm134, %v126, %v131
    %v136 = vrsqrt.pop %v125
    %v137 = vmul.f32 %v136, %v125
    %v138 = vmul.f32 %v137, %v136
    %v139 = vmul.f32 0.5, %v138
    %v140 = vsub.f32 1.5, %v139
    %v141 = vmul.f32 %v136, %v140
    %vm142 = vweird.f32 %v125
    %vm143 = vweird.f32 %v136
    %vm144 = vmor %vm142, %vm143
    %v145 = vsel %vm144, %v136, %v141
    %v146 = vmul.f32 %v112, %v135
    %v147 = vmul.f32 %v113, %v145
    %v148 = vperm.slane %v94, 0
    %v149 = vmul.f32 %v146, %v148
    %v150 = vmul.f32 %v147, %v148
    %v151 = vperm.slane %v95, 0
    %v152 = vadd.f32 %v149, %v151
    %v153 = vadd.f32 %v150, %v151
    %v154 = vld [vmem:[#allocation2 + $0x142] sm:$0x1]
    %v155 = vperm.slane %v154, 0
    %v157 = vsel %vm96, %v152, 0
    %v160 = vsel %vm96, %v153, 0
    %162 = vmatpush.msra.mxu0 0.0
    %163 = vmatpush.msra.mxu0 0.0
    %164 = vmatpush.msra.mxu0 0.0
    %165 = vmatpush.msra.mxu0 0.0
    %166 = vmatpush.msra.mxu0 0.0
    %167 = vmatpush.msra.mxu0 0.0
    %168 = vmatpush.msra.mxu0 0.0
    %169 = vmatpush.msra.mxu0 0.0
    %170 = vmatpush.msra.mxu0 0.0
    %171 = vmatpush.msra.mxu0 0.0
    %172 = vmatpush.msra.mxu0 0.0
    %173 = vmatpush.msra.mxu0 0.0
    %174 = vmatpush.msra.mxu0 %v46
    %175 = vmatpush.msra.mxu0 %v45
    %176 = vmatpush.msra.mxu0 %v44
    %177 = vmatpush.msra.mxu0 %v43
    %178 = vmatmul.f32.gmra.mxu0 %v157
    %v179 = vpop.f32.mrf.mxu0
    %v180 = vadd.f32 %v155, %v179
    %181 = vmatmul.f32.gmra.mxu0 %v160
    %v182 = vpop.f32.mrf.mxu0
    %v183 = vadd.f32 %v155, %v182
    %184 = vdwg.mxu0
    %187 = vrot.lane.b32.xlu0 %v180, 112
    %v188 = vpop.permute.xlu0 %187
    %189 = vrot.lane.b32.xlu0 %v183, 112
    %v190 = vpop.permute.xlu0 %189
    %vm191 = vcmask 130048
    %v192 = vsel %vm191, %v180, 0
    %v194 = vsel %vm191, %v183, 0
    %v196 = vsel %vm191, %v188, 0
    %v198 = vsel %vm191, %v190, 0
    %200 = vmatpush.xpose.msra.mxu0 0.0
    %201 = vmatpush.xpose.msra.mxu0 0.0
    %202 = vmatpush.xpose.msra.mxu0 0.0
    %203 = vmatpush.xpose.msra.mxu0 0.0
    %204 = vmatpush.xpose.msra.mxu0 0.0
    %205 = vmatpush.xpose.msra.mxu0 0.0
    %206 = vmatpush.xpose.msra.mxu0 0.0
    %207 = vmatpush.xpose.msra.mxu0 0.0
    %208 = vmatpush.xpose.msra.mxu0 0.0
    %209 = vmatpush.xpose.msra.mxu0 0.0
    %210 = vmatpush.xpose.msra.mxu0 0.0
    %211 = vmatpush.xpose.msra.mxu0 0.0
    %212 = vmatpush.xpose.msra.mxu0 0.0
    %213 = vmatpush.xpose.msra.mxu0 0.0
    %214 = vmatpush.xpose.msra.mxu0 %v198
    %215 = vmatpush.xpose.msra.mxu0 %v196
    %216 = vmatmul.f32.gmra.mxu0 %v192
    %v217 = vpop.f32.mrf.mxu0
    %v218 = vadd.f32 0.0, %v217
    %219 = vmatmul.f32.gmra.mxu0 %v194
    %v220 = vpop.f32.mrf.mxu0
    %v221 = vadd.f32 0.0, %v220
    %222 = vdwg.mxu0
    %v223 = vmul.f32 %v218, 0.25
    %v224 = vmul.f32 %v221, 0.25
    %v225 = vadd.f32 %v223, %v69
    %v226 = vadd.f32 %v224, %v70
    %v227 = vsel %vm191, %v225, -inf
    %228 = vmax.xlane.f32.xlu0 %v227
    %v229 = vpop.xlane.xlu0 %228
    %v230 = vsel %vm191, %v226, -inf
    %231 = vmax.xlane.f32.xlu0 %v230
    %v232 = vpop.xlane.xlu0 %231
    %v233 = vsub.f32 %v225, %v229
    %v234 = vsub.f32 %v226, %v232
    %v235 = vmul.f32 %v233, 1.442695
    %v236 = vpow.pop %v235
    %v237 = vmul.f32 %v234, 1.442695
    %v238 = vpow.pop %v237
    %v239 = vsel %vm191, %v236, 0.0
    %240 = vadd.xlane.f32.xlu0 %v239
    %v241 = vpop.xlane.xlu0 %240
    %v242 = vsel %vm191, %v238, 0.0
    %243 = vadd.xlane.f32.xlu0 %v242
    %v244 = vpop.xlane.xlu0 %243
    %v245 = vrcp.pop %v241
    %v246 = vrcp.pop %v244
    %v247 = vmul.f32 %v236, %v245
    %v248 = vmul.f32 %v238, %v246
    %249 = vrot.lane.b32.xlu0 %v180, 96
    %v250 = vpop.permute.xlu0 %249
    %251 = vrot.lane.b32.xlu0 %v183, 96
    %v252 = vpop.permute.xlu0 %251
    %v256 = vsel %vm191, %v247, 0
    %v259 = vsel %vm191, %v248, 0
    %261 = vmatpush.msra.mxu0 0.0
    %262 = vmatpush.msra.mxu0 0.0
    %263 = vmatpush.msra.mxu0 0.0
    %264 = vmatpush.msra.mxu0 0.0
    %265 = vmatpush.msra.mxu0 0.0
    %266 = vmatpush.msra.mxu0 0.0
    %267 = vmatpush.msra.mxu0 0.0
    %268 = vmatpush.msra.mxu0 0.0
    %269 = vmatpush.msra.mxu0 0.0
    %270 = vmatpush.msra.mxu0 0.0
    %271 = vmatpush.msra.mxu0 0.0
    %272 = vmatpush.msra.mxu0 0.0
    %273 = vmatpush.msra.mxu0 0.0
    %274 = vmatpush.msra.mxu0 0.0
    %275 = vmatpush.msra.mxu0 %v252
    %276 = vmatpush.msra.mxu0 %v250
    %277 = vmatmul.f32.gmra.mxu0 %v256
    %v278 = vpop.f32.mrf.mxu0
    %v279 = vadd.f32 0.0, %v278
    %280 = vmatmul.f32.gmra.mxu0 %v259
    %v281 = vpop.f32.mrf.mxu0
    %v282 = vadd.f32 0.0, %v281
    %283 = vdwg.mxu0
    %284 = vrot.lane.b32.xlu0 %v180, 80
    %v285 = vpop.permute.xlu0 %284
    %286 = vrot.lane.b32.xlu0 %v183, 80
    %v287 = vpop.permute.xlu0 %286
    %288 = vrot.lane.b32.xlu0 %v180, 64
    %v289 = vpop.permute.xlu0 %288
    %290 = vrot.lane.b32.xlu0 %v183, 64
    %v291 = vpop.permute.xlu0 %290
    %v292 = vsel %vm191, %v285, 0
    %v294 = vsel %vm191, %v287, 0
    %v296 = vsel %vm191, %v289, 0
    %v298 = vsel %vm191, %v291, 0
    %300 = vmatpush.xpose.msra.mxu0 0.0
    %301 = vmatpush.xpose.msra.mxu0 0.0
    %302 = vmatpush.xpose.msra.mxu0 0.0
    %303 = vmatpush.xpose.msra.mxu0 0.0
    %304 = vmatpush.xpose.msra.mxu0 0.0
    %305 = vmatpush.xpose.msra.mxu0 0.0
    %306 = vmatpush.xpose.msra.mxu0 0.0
    %307 = vmatpush.xpose.msra.mxu0 0.0
    %308 = vmatpush.xpose.msra.mxu0 0.0
    %309 = vmatpush.xpose.msra.mxu0 0.0
    %310 = vmatpush.xpose.msra.mxu0 0.0
    %311 = vmatpush.xpose.msra.mxu0 0.0
    %312 = vmatpush.xpose.msra.mxu0 0.0
    %313 = vmatpush.xpose.msra.mxu0 0.0
    %314 = vmatpush.xpose.msra.mxu0 %v298
    %315 = vmatpush.xpose.msra.mxu0 %v296
    %316 = vmatmul.f32.gmra.mxu0 %v292
    %v317 = vpop.f32.mrf.mxu0
    %v318 = vadd.f32 0.0, %v317
    %319 = vmatmul.f32.gmra.mxu0 %v294
    %v320 = vpop.f32.mrf.mxu0
    %v321 = vadd.f32 0.0, %v320
    %322 = vdwg.mxu0
    %v323 = vmul.f32 %v318, 0.25
    %v324 = vmul.f32 %v321, 0.25
    %v325 = vadd.f32 %v323, %v69
    %v326 = vadd.f32 %v324, %v70
    %v327 = vsel %vm191, %v325, -inf
    %328 = vmax.xlane.f32.xlu0 %v327
    %v329 = vpop.xlane.xlu0 %328
    %v330 = vsel %vm191, %v326, -inf
    %331 = vmax.xlane.f32.xlu0 %v330
    %v332 = vpop.xlane.xlu0 %331
    %v333 = vsub.f32 %v325, %v329
    %v334 = vsub.f32 %v326, %v332
    %v335 = vmul.f32 %v333, 1.442695
    %v336 = vpow.pop %v335
    %v337 = vmul.f32 %v334, 1.442695
    %v338 = vpow.pop %v337
    %v339 = vsel %vm191, %v336, 0.0
    %340 = vadd.xlane.f32.xlu0 %v339
    %v341 = vpop.xlane.xlu0 %340
    %v342 = vsel %vm191, %v338, 0.0
    %343 = vadd.xlane.f32.xlu0 %v342
    %v344 = vpop.xlane.xlu0 %343
    %v345 = vrcp.pop %v341
    %v346 = vrcp.pop %v344
    %v347 = vmul.f32 %v336, %v345
    %v348 = vmul.f32 %v338, %v346
    %349 = vrot.lane.b32.xlu0 %v180, 48
    %v350 = vpop.permute.xlu0 %349
    %351 = vrot.lane.b32.xlu0 %v183, 48
    %v352 = vpop.permute.xlu0 %351
    %v356 = vsel %vm191, %v347, 0
    %v359 = vsel %vm191, %v348, 0
    %361 = vmatpush.msra.mxu0 0.0
    %362 = vmatpush.msra.mxu0 0.0
    %363 = vmatpush.msra.mxu0 0.0
    %364 = vmatpush.msra.mxu0 0.0
    %365 = vmatpush.msra.mxu0 0.0
    %366 = vmatpush.msra.mxu0 0.0
    %367 = vmatpush.msra.mxu0 0.0
    %368 = vmatpush.msra.mxu0 0.0
    %369 = vmatpush.msra.mxu0 0.0
    %370 = vmatpush.msra.mxu0 0.0
    %371 = vmatpush.msra.mxu0 0.0
    %372 = vmatpush.msra.mxu0 0.0
    %373 = vmatpush.msra.mxu0 0.0
    %374 = vmatpush.msra.mxu0 0.0
    %375 = vmatpush.msra.mxu0 %v352
    %376 = vmatpush.msra.mxu0 %v350
    %377 = vmatmul.f32.gmra.mxu0 %v356
    %v378 = vpop.f32.mrf.mxu0
    %v379 = vadd.f32 0.0, %v378
    %380 = vmatmul.f32.gmra.mxu0 %v359
    %v381 = vpop.f32.mrf.mxu0
    %v382 = vadd.f32 0.0, %v381
    %383 = vdwg.mxu0
    %v385 = vsel %vm191, %v379, 0
    %v388 = vsel %vm191, %v382, 0
    %390 = vmatpush.msra.mxu0 0.0
    %391 = vmatpush.msra.mxu0 0.0
    %392 = vmatpush.msra.mxu0 0.0
    %393 = vmatpush.msra.mxu0 0.0
    %394 = vmatpush.msra.mxu0 0.0
    %395 = vmatpush.msra.mxu0 0.0
    %396 = vmatpush.msra.mxu0 0.0
    %397 = vmatpush.msra.mxu0 0.0
    %398 = vmatpush.msra.mxu0 0.0
    %399 = vmatpush.msra.mxu0 0.0
    %400 = vmatpush.msra.mxu0 0.0
    %401 = vmatpush.msra.mxu0 0.0
    %402 = vmatpush.msra.mxu0 0.0
    %403 = vmatpush.msra.mxu0 0.0
    %404 = vmatpush.msra.mxu0 %v50
    %405 = vmatpush.msra.mxu0 %v49
    %406 = vmatmul.f32.gmra.mxu0 %v385
    %v407 = vpop.f32.mrf.mxu0
    %v408 = vadd.f32 0.0, %v407
    %409 = vmatmul.f32.gmra.mxu0 %v388
    %v410 = vpop.f32.mrf.mxu0
    %v411 = vadd.f32 0.0, %v410
    %412 = vdwg.mxu0
    %v414 = vsel %vm191, %v279, 0
    %v417 = vsel %vm191, %v282, 0
    %419 = vmatpush.msra.mxu0 0.0
    %420 = vmatpush.msra.mxu0 0.0
    %421 = vmatpush.msra.mxu0 0.0
    %422 = vmatpush.msra.mxu0 0.0
    %423 = vmatpush.msra.mxu0 0.0
    %424 = vmatpush.msra.mxu0 0.0
    %425 = vmatpush.msra.mxu0 0.0
    %426 = vmatpush.msra.mxu0 0.0
    %427 = vmatpush.msra.mxu0 0.0
    %428 = vmatpush.msra.mxu0 0.0
    %429 = vmatpush.msra.mxu0 0.0
    %430 = vmatpush.msra.mxu0 0.0
    %431 = vmatpush.msra.mxu0 0.0
    %432 = vmatpush.msra.mxu0 0.0
    %433 = vmatpush.msra.mxu0 %v48
    %434 = vmatpush.msra.mxu0 %v47
    %435 = vmatmul.f32.gmra.mxu0 %v414
    %v436 = vpop.f32.mrf.mxu0
    %v437 = vadd.f32 %v408, %v436
    %438 = vmatmul.f32.gmra.mxu0 %v417
    %v439 = vpop.f32.mrf.mxu0
    %v440 = vadd.f32 %v411, %v439
    %441 = vdwg.mxu0
    %v442 = vld [vmem:[#allocation2 + $0x143] sm:$0x1]
    %v443 = vperm.slane %v442, 0
    %v444 = vadd.f32 %v437, %v443
    %v445 = vadd.f32 %v440, %v443
    %v446 = vadd.f32 %v152, %v444
    %v447 = vadd.f32 %v153, %v445
    %v448 = vld [vmem:[#allocation2 + $0x144] sm:$0x1]
    %v449 = vld [vmem:[#allocation2 + $0x145] sm:$0x1]
    %v450 = vsel %vm96, %v446, 0.0
    %451 = vadd.xlane.f32.xlu0 %v450
    %v452 = vpop.xlane.xlu0 %451
    %v453 = vsel %vm96, %v447, 0.0
    %454 = vadd.xlane.f32.xlu0 %v453
    %v455 = vpop.xlane.xlu0 %454
    %v456 = vmul.f32 %v452, %v109
    %v457 = vmul.f32 %v455, %v109
    %v458 = vsub.f32 %v446, %v456
    %v459 = vsub.f32 %v447, %v457
    %v460 = vmul.f32 %v458, %v458
    %v461 = vmul.f32 %v459, %v459
    %v462 = vsel %vm96, %v460, 0.0
    %463 = vadd.xlane.f32.xlu0 %v462
    %v464 = vpop.xlane.xlu0 %463
    %v465 = vsel %vm96, %v461, 0.0
    %466 = vadd.xlane.f32.xlu0 %v465
    %v467 = vpop.xlane.xlu0 %466
    %v468 = vmul.f32 %v464, %v109
    %v469 = vmul.f32 %v467, %v109
    %v470 = vadd.f32 %v468, 1e-12
    %v471 = vadd.f32 %v469, 1e-12
    %v472 = vrsqrt.pop %v470
    %v473 = vmul.f32 %v472, %v470
    %v474 = vmul.f32 %v473, %v472
    %v475 = vmul.f32 0.5, %v474
    %v476 = vsub.f32 1.5, %v475
    %v477 = vmul.f32 %v472, %v476
    %vm478 = vweird.f32 %v470
    %vm479 = vweird.f32 %v472
    %vm480 = vmor %vm478, %vm479
    %v481 = vsel %vm480, %v472, %v477
    %v482 = vrsqrt.pop %v471
    %v483 = vmul.f32 %v482, %v471
    %v484 = vmul.f32 %v483, %v482
    %v485 = vmul.f32 0.5, %v484
    %v486 = vsub.f32 1.5, %v485
    %v487 = vmul.f32 %v482, %v486
    %vm488 = vweird.f32 %v471
    %vm489 = vweird.f32 %v482
    %vm490 = vmor %vm488, %vm489
    %v491 = vsel %vm490, %v482, %v487
    %v492 = vmul.f32 %v458, %v481
    %v493 = vmul.f32 %v459, %v491
    %v494 = vperm.slane %v448, 0
    %v495 = vmul.f32 %v492, %v494
    %v496 = vmul.f32 %v493, %v494
    %v497 = vperm.slane %v449, 0
    %v498 = vadd.f32 %v495, %v497
    %v499 = vadd.f32 %v496, %v497
    %v500 = vld [vmem:[#allocation2 + $0x146] sm:$0x1]
    %v501 = vperm.slane %v500, 0
    %v503 = vsel %vm96, %v498, 0
    %v506 = vsel %vm96, %v499, 0
    %508 = vmatpush.msra.mxu0 0.0
    %509 = vmatpush.msra.mxu0 0.0
    %510 = vmatpush.msra.mxu0 0.0
    %511 = vmatpush.msra.mxu0 0.0
    %512 = vmatpush.msra.mxu0 0.0
    %513 = vmatpush.msra.mxu0 0.0
    %514 = vmatpush.msra.mxu0 0.0
    %515 = vmatpush.msra.mxu0 0.0
    %516 = vmatpush.msra.mxu0 0.0
    %517 = vmatpush.msra.mxu0 0.0
    %518 = vmatpush.msra.mxu0 0.0
    %519 = vmatpush.msra.mxu0 0.0
    %520 = vmatpush.msra.mxu0 %v54
    %521 = vmatpush.msra.mxu0 %v53
    %522 = vmatpush.msra.mxu0 %v52
    %523 = vmatpush.msra.mxu0 %v51
    %524 = vmatmul.f32.gmra.mxu0 %v503
    %v525 = vpop.f32.mrf.mxu0
    %v526 = vadd.f32 %v501, %v525
    %527 = vmatmul.f32.gmra.mxu0 %v506
    %v528 = vpop.f32.mrf.mxu0
    %v529 = vadd.f32 %v501, %v528
    %530 = vdwg.mxu0
    %v531 = vmul.f32 %v526, %v526
    %v532 = vmul.f32 %v529, %v529
    %v533 = vmul.f32 %v526, %v531
    %v534 = vmul.f32 %v529, %v532
    %v535 = vmul.f32 %v533, 0.044715
    %v536 = vmul.f32 %v534, 0.044715
    %v537 = vadd.f32 %v526, %v535
    %v538 = vadd.f32 %v529, %v536
    %v539 = vmul.f32 %v537, 0.7978846
    %v540 = vmul.f32 %v538, 0.7978846
    %v541 = vtanh.pop %v539
    %v542 = vtanh.pop %v540
    %v543 = vadd.f32 %v541, 1.0
    %v544 = vadd.f32 %v542, 1.0
    %v545 = vmul.f32 %v543, 0.5
    %v546 = vmul.f32 %v544, 0.5
    %v547 = vmul.f32 %v526, %v545
    %v548 = vmul.f32 %v529, %v546
    %v549 = vld [vmem:[#allocation2 + $0x147] sm:$0x1]
    %v550 = vperm.slane %v549, 0
    %vm551 = vcmask 523264
    %v553 = vsel %vm551, %v547, 0
    %v556 = vsel %vm551, %v548, 0
    %558 = vmatpush.msra.mxu0 0.0
    %559 = vmatpush.msra.mxu0 0.0
    %560 = vmatpush.msra.mxu0 0.0
    %561 = vmatpush.msra.mxu0 0.0
    %562 = vmatpush.msra.mxu0 0.0
    %563 = vmatpush.msra.mxu0 0.0
    %564 = vmatpush.msra.mxu0 0.0
    %565 = vmatpush.msra.mxu0 0.0
    %566 = vmatpush.msra.mxu0 %v62
    %567 = vmatpush.msra.mxu0 %v61
    %568 = vmatpush.msra.mxu0 %v60
    %569 = vmatpush.msra.mxu0 %v59
    %570 = vmatpush.msra.mxu0 %v58
    %571 = vmatpush.msra.mxu0 %v57
    %572 = vmatpush.msra.mxu0 %v56
    %573 = vmatpush.msra.mxu0 %v55
    %574 = vmatmul.f32.gmra.mxu0 %v553
    %v575 = vpop.f32.mrf.mxu0
    %v576 = vadd.f32 %v550, %v575
    %577 = vmatmul.f32.gmra.mxu0 %v556
    %v578 = vpop.f32.mrf.mxu0
    %v579 = vadd.f32 %v550, %v578
    %580 = vdwg.mxu0
    %v581 = vadd.f32 %v498, %v576
    %v582 = vadd.f32 %v499, %v579
    %v583 = vld [vmem:[#allocation2 + $0x148] sm:$0x1]
    %v584 = vld [vmem:[#allocation2 + $0x149] sm:$0x1]
    %v585 = vsel %vm96, %v581, 0.0
    %586 = vadd.xlane.f32.xlu0 %v585
    %v587 = vpop.xlane.xlu0 %586
    %v588 = vsel %vm96, %v582, 0.0
    %589 = vadd.xlane.f32.xlu0 %v588
    %v590 = vpop.xlane.xlu0 %589
    %v591 = vmul.f32 %v587, %v109
    %v592 = vmul.f32 %v590, %v109
    %v593 = vsub.f32 %v581, %v591
    %v594 = vsub.f32 %v582, %v592
    %v595 = vmul.f32 %v593, %v593
    %v596 = vmul.f32 %v594, %v594
    %v597 = vsel %vm96, %v595, 0.0
    %598 = vadd.xlane.f32.xlu0 %v597
    %v599 = vpop.xlane.xlu0 %598
    %v600 = vsel %vm96, %v596, 0.0
    %601 = vadd.xlane.f32.xlu0 %v600
    %v602 = vpop.xlane.xlu0 %601
    %v603 = vmul.f32 %v599, %v109
    %v604 = vmul.f32 %v602, %v109
    %v605 = vadd.f32 %v603, 1e-12
    %v606 = vadd.f32 %v604, 1e-12
    %v607 = vrsqrt.pop %v605
    %v608 = vmul.f32 %v607, %v605
    %v609 = vmul.f32 %v608, %v607
    %v610 = vmul.f32 0.5, %v609
    %v611 = vsub.f32 1.5, %v610
    %v612 = vmul.f32 %v607, %v611
    %vm613 = vweird.f32 %v605
    %vm614 = vweird.f32 %v607
    %vm615 = vmor %vm613, %vm614
    %v616 = vsel %vm615, %v607, %v612
    %v617 = vrsqrt.pop %v606
    %v618 = vmul.f32 %v617, %v606
    %v619 = vmul.f32 %v618, %v617
    %v620 = vmul.f32 0.5, %v619
    %v621 = vsub.f32 1.5, %v620
    %v622 = vmul.f32 %v617, %v621
    %vm623 = vweird.f32 %v606
    %vm624 = vweird.f32 %v617
    %vm625 = vmor %vm623, %vm624
    %v626 = vsel %vm625, %v617, %v622
    %v627 = vmul.f32 %v593, %v616
    %v628 = vmul.f32 %v594, %v626
    %v629 = vperm.slane %v583, 0
    %v630 = vmul.f32 %v627, %v629
    %v631 = vmul.f32 %v628, %v629
    %v632 = vperm.slane %v584, 0
    %v633 = vadd.f32 %v630, %v632
    %v634 = vadd.f32 %v631, %v632
    %v635 = vld [vmem:[#allocation2 + $0x14a] sm:$0x1]
    %v636 = vperm.slane %v635, 0
    %v638 = vsel %vm96, %v633, 0
    %v641 = vsel %vm96, %v634, 0
    %643 = vmatpush.msra.mxu0 0.0
    %644 = vmatpush.msra.mxu0 0.0
    %645 = vmatpush.msra.mxu0 0.0
    %646 = vmatpush.msra.mxu0 0.0
    %647 = vmatpush.msra.mxu0 0.0
    %648 = vmatpush.msra.mxu0 0.0
    %649 = vmatpush.msra.mxu0 0.0
    %650 = vmatpush.msra.mxu0 0.0
    %651 = vmatpush.msra.mxu0 0.0
    %652 = vmatpush.msra.mxu0 0.0
    %653 = vmatpush.msra.mxu0 0.0
    %654 = vmatpush.msra.mxu0 0.0
    %655 = vmatpush.msra.mxu0 %v66
    %656 = vmatpush.msra.mxu0 %v65
    %657 = vmatpush.msra.mxu0 %v64
    %658 = vmatpush.msra.mxu0 %v63
    %659 = vmatmul.f32.gmra.mxu0 %v638
    %v660 = vpop.f32.mrf.mxu0
    %v661 = vadd.f32 %v636, %v660
    %662 = vmatmul.f32.gmra.mxu0 %v641
    %v663 = vpop.f32.mrf.mxu0
    %v664 = vadd.f32 %v636, %v663
    %665 = vdwg.mxu0
    %666 = vst [vmem:[%s2] sm:$0xff] %v661
    %667 = vst [vmem:[%s2 + $0x8] sm:$0xff] %v664
    // Predicated region
    $region14: #{shared_model_forward.1} parent=1 // pred_check
      _
    $region15: #{shared_model_forward.1} parent=1 // pred_check_branch
      %669 = sbr.rel (0) target = $region17
    $region16: #{shared_model_forward.1} parent=1 // pred_region
      _
    $region17: #{shared_model_forward.1} parent=1 // pred_fallthru
      _
    // Predicated region
    $region18: #{shared_model_forward.1} parent=1 // pred_check
      _
    $region19: #{shared_model_forward.1} parent=1 // pred_check_branch
      %671 = sbr.rel (0) target = $region21
    $region20: #{shared_model_forward.1} parent=1 // pred_region
      _
    $region21: #{shared_model_forward.1} parent=1 // pred_fallthru
      _
    %672 = vsyncpa [#allocation3], 1

</llo_original>
